<compile_context>
chip_gen: v7x
topology: tpu7x:2x2x1
jax: 0.10.0
libtpu: 0.0.40
codegen_flags: <defaults>
</compile_context>

<pallas_src>
import jax
import jax.numpy as jnp
from jax.experimental import pallas as pl
from jax.experimental.pallas import tpu as pltpu


def _make_concat_dma_kernel(rows_per_step: int, f1: int, f2: int):
    """Kernel: two strided HBM->HBM DMAs for this grid step's row range."""

    def kernel(upper_ref, lower_ref, out_ref, sem):
        i = pl.program_id(0)
        rows = pl.ds(i * rows_per_step, rows_per_step)

        cp_hi = pltpu.make_async_copy(
            upper_ref.at[rows, :], out_ref.at[rows, pl.ds(0, f1)], sem.at[0]
        )
        cp_lo = pltpu.make_async_copy(
            lower_ref.at[rows, :], out_ref.at[rows, pl.ds(f1, f2)], sem.at[1]
        )
        # Issue both, then wait on both: the two halves overlap on the DMA
        # engines; the TensorCore does no vector work at all.
        cp_hi.start()
        cp_lo.start()
        cp_hi.wait()
        cp_lo.wait()

    return kernel


def simple_skip_connection(
    upper_x: jax.Array, lower_x: jax.Array, *, xla_concat_below_bytes: int = 0
) -> jax.Array:
    """Pallas equivalent of SimpleSkipConnection.forward (torch.cat dim=1, NCHW)."""
    assert upper_x.shape[0] == lower_x.shape[0], "batch mismatch"
    assert upper_x.shape[2:] == lower_x.shape[2:], "spatial mismatch"
    assert upper_x.dtype == lower_x.dtype, "dtype mismatch"

    n, c1, h, w = upper_x.shape
    c2 = lower_x.shape[1]
    c_out = c1 + c2
    f1, f2 = c1 * h * w, c2 * h * w
    f_out = f1 + f2

    itemsize = jnp.dtype(upper_x.dtype).itemsize
    total_bytes = n * f_out * itemsize

    # For very small tensors XLA's native concat (a single fused copy) beats
    # the pallas_call fixed cost.  The demo passes the default 0 so the Pallas
    # kernel always runs.
    if total_bytes < xla_concat_below_bytes:
        return jnp.concatenate([upper_x, lower_x], axis=1)

    # Lane-dense / row-major 2-D views: channel-concat in NCHW == concat along
    # the flattened per-batch feature axis (layout-preserving reshape, free).
    upper2d = upper_x.reshape(n, f1)
    lower2d = lower_x.reshape(n, f2)

    # Split rows across >=2 "parallel" grid steps when possible so v7x's two
    # TensorCores each drive their own DMAs; on v5e/v6e it's a cheap loop.
    n_steps = 2 if (n >= 2 and n % 2 == 0) else 1
    rows_per_step = n // n_steps
    # TODO(synk): for odd n (or n == 1 with huge rows) also split along the
    # flattened feature axis so v7x's second TensorCore still gets work.

    out2d = pl.pallas_call(
        _make_concat_dma_kernel(rows_per_step, f1, f2),
        out_shape=jax.ShapeDtypeStruct((n, f_out), upper_x.dtype),
        grid=(n_steps,),
        in_specs=[
            pl.BlockSpec(memory_space=pl.ANY),  # raw HBM ref, no auto-DMA
            pl.BlockSpec(memory_space=pl.ANY),
        ],
        out_specs=pl.BlockSpec(memory_space=pl.ANY),
        scratch_shapes=[pltpu.SemaphoreType.DMA((2,))],
        compiler_params=pltpu.CompilerParams(
            dimension_semantics=("parallel",),
        ),
        cost_estimate=pl.CostEstimate(
            flops=0,
            transcendentals=0,
            bytes_accessed=2 * total_bytes,  # read everything once, write once
        ),
    )(upper2d, lower2d)

    # Reshape back to NCHW; identical memory layout to torch.cat(dim=1).
    return out2d.reshape(n, c_out, h, w)


if __name__ == "__main__":
    key = jax.random.PRNGKey(0)
    k_upper, k_lower = jax.random.split(key)

    # Small shapes consistent with a U-Net skip connection: NCHW.
    upper_x = jax.random.normal(k_upper, (2, 4, 16, 16), dtype=jnp.float32)
    lower_x = jax.random.normal(k_lower, (2, 6, 16, 16), dtype=jnp.float32)

    out = simple_skip_connection(upper_x, lower_x)
    out = jax.block_until_ready(out)

    # Correctness check against plain-JAX concat (== torch.cat dim=1).
    ref = jnp.concatenate([upper_x, lower_x], axis=1)
    assert out.shape == (2, 10, 16, 16)
    assert out.dtype == upper_x.dtype
    assert jnp.array_equal(out, ref)

    print("KERNEL_OK")
</pallas_src>

<mosaic_0001>
module attributes {stable_mosaic.version = 11 : i64} {
  func.func @kernel(%arg0: i32, %arg1: memref<2x1024xf32, #tpu.memory_space<any>>, %arg2: memref<2x1536xf32, #tpu.memory_space<any>>, %arg3: memref<2x2560xf32, #tpu.memory_space<any>>, %arg4: memref<2x!tpu.dma_semaphore, #tpu.memory_space<semaphore_mem>>) attributes {dimension_semantics = [#tpu.dimension_semantics<parallel>], iteration_bounds = array<i64: 2>, scalar_prefetch = 0 : i64, scratch_operands = 1 : i64, tpu.core_type = #tpu.core_type<tc>, window_params = [{}, {}, {}]} {
    %c1_i32 = arith.constant 1 : i32
    %0 = arith.muli %arg0, %c1_i32 : i32
    %c0_i32 = arith.constant 0 : i32
    %c0_i32_0 = arith.constant 0 : i32
    %1 = tpu.memref_slice %arg1[%0, %c0_i32_0] : memref<2x1024xf32, #tpu.memory_space<any>> -> memref<1x1024xf32, #tpu.memory_space<any>>
    %c0_i32_1 = arith.constant 0 : i32
    %2 = tpu.memref_slice %arg3[%0, %c0_i32_1] : memref<2x2560xf32, #tpu.memory_space<any>> -> memref<1x1024xf32, #tpu.memory_space<any>>
    %3 = tpu.memref_slice %arg4[%c0_i32] : memref<2x!tpu.dma_semaphore, #tpu.memory_space<semaphore_mem>> -> memref<1x!tpu.dma_semaphore, #tpu.memory_space<semaphore_mem>>
    %4 = tpu.memref_squeeze %3 : memref<1x!tpu.dma_semaphore, #tpu.memory_space<semaphore_mem>> -> memref<!tpu.dma_semaphore, #tpu.memory_space<semaphore_mem>>
    tpu.enqueue_dma source(%1 : memref<1x1024xf32, #tpu.memory_space<any>>) target(%2 : memref<1x1024xf32, #tpu.memory_space<any>>) target_semaphore(%4 : memref<!tpu.dma_semaphore, #tpu.memory_space<semaphore_mem>>)
    %c1_i32_2 = arith.constant 1 : i32
    %c0_i32_3 = arith.constant 0 : i32
    %5 = tpu.memref_slice %arg2[%0, %c0_i32_3] : memref<2x1536xf32, #tpu.memory_space<any>> -> memref<1x1536xf32, #tpu.memory_space<any>>
    %c1024_i32 = arith.constant 1024 : i32
    %6 = tpu.memref_slice %arg3[%0, %c1024_i32] : memref<2x2560xf32, #tpu.memory_space<any>> -> memref<1x1536xf32, #tpu.memory_space<any>>
    %7 = tpu.memref_slice %arg4[%c1_i32_2] : memref<2x!tpu.dma_semaphore, #tpu.memory_space<semaphore_mem>> -> memref<1x!tpu.dma_semaphore, #tpu.memory_space<semaphore_mem>>
    %8 = tpu.memref_squeeze %7 : memref<1x!tpu.dma_semaphore, #tpu.memory_space<semaphore_mem>> -> memref<!tpu.dma_semaphore, #tpu.memory_space<semaphore_mem>>
    tpu.enqueue_dma source(%5 : memref<1x1536xf32, #tpu.memory_space<any>>) target(%6 : memref<1x1536xf32, #tpu.memory_space<any>>) target_semaphore(%8 : memref<!tpu.dma_semaphore, #tpu.memory_space<semaphore_mem>>)
    %c0_i32_4 = arith.constant 0 : i32
    %c0_i32_5 = arith.constant 0 : i32
    %9 = tpu.memref_slice %arg1[%0, %c0_i32_5] : memref<2x1024xf32, #tpu.memory_space<any>> -> memref<1x1024xf32, #tpu.memory_space<any>>
    %c0_i32_6 = arith.constant 0 : i32
    %10 = tpu.memref_slice %arg3[%0, %c0_i32_6] : memref<2x2560xf32, #tpu.memory_space<any>> -> memref<1x1024xf32, #tpu.memory_space<any>>
    %11 = tpu.memref_slice %arg4[%c0_i32_4] : memref<2x!tpu.dma_semaphore, #tpu.memory_space<semaphore_mem>> -> memref<1x!tpu.dma_semaphore, #tpu.memory_space<semaphore_mem>>
    %12 = tpu.memref_squeeze %11 : memref<1x!tpu.dma_semaphore, #tpu.memory_space<semaphore_mem>> -> memref<!tpu.dma_semaphore, #tpu.memory_space<semaphore_mem>>
    tpu.wait_dma2 semaphore(%12 : memref<!tpu.dma_semaphore, #tpu.memory_space<semaphore_mem>>) src(%9 : memref<1x1024xf32, #tpu.memory_space<any>>) dst(%10 : memref<1x1024xf32, #tpu.memory_space<any>>)
    %c1_i32_7 = arith.constant 1 : i32
    %c0_i32_8 = arith.constant 0 : i32
    %13 = tpu.memref_slice %arg2[%0, %c0_i32_8] : memref<2x1536xf32, #tpu.memory_space<any>> -> memref<1x1536xf32, #tpu.memory_space<any>>
    %c1024_i32_9 = arith.constant 1024 : i32
    %14 = tpu.memref_slice %arg3[%0, %c1024_i32_9] : memref<2x2560xf32, #tpu.memory_space<any>> -> memref<1x1536xf32, #tpu.memory_space<any>>
    %15 = tpu.memref_slice %arg4[%c1_i32_7] : memref<2x!tpu.dma_semaphore, #tpu.memory_space<semaphore_mem>> -> memref<1x!tpu.dma_semaphore, #tpu.memory_space<semaphore_mem>>
    %16 = tpu.memref_squeeze %15 : memref<1x!tpu.dma_semaphore, #tpu.memory_space<semaphore_mem>> -> memref<!tpu.dma_semaphore, #tpu.memory_space<semaphore_mem>>
    tpu.wait_dma2 semaphore(%16 : memref<!tpu.dma_semaphore, #tpu.memory_space<semaphore_mem>>) src(%13 : memref<1x1536xf32, #tpu.memory_space<any>>) dst(%14 : memref<1x1536xf32, #tpu.memory_space<any>>)
    return
  }
}

</mosaic_0001>

<llo_original>
// kernel: tpu_custom_call.1
$region0: #{tpu_custom_call.1}
  #allocation0 [shape = 'u32[]', space=smem, size = 0x4, offset = 0x4, fixed_abs, tag = 'smem constant byte address 0x4 - core index']
  #allocation1 [shape = 'u32[144,128]{1,0:T(1,128)}', space=vmem, size = 0x12000, scoped, tag = 'internal scratch']
  #allocation2 [shape = 's32[2]{0}', space=sflag, size = 0x8, scoped, tag = 'scratch operand']
  #allocation3 [shape = 's32[]', space=sflag, size = 0x4, offset = 0, fixed_abs, tag = 'sflag constant byte address 0x0 - dummy sync flag']
  #allocation5 [shape = 's32[]', space=sflag, size = 0x4, offset = 0, fixed_abs, tag = 'sflag constant byte address 0x0 - dummy sync flag']
  %s0 = inlined_call_operand.hbm [shape: f32[2,1024], index: 0, kind: input, shape index: {}]
  %s1 = inlined_call_operand.hbm [shape: f32[2,1536], index: 1, kind: input, shape index: {}]
  %s2 = inlined_call_operand.hbm [shape: f32[2,2560], index: 2, kind: output, shape index: {}]
  %s3 = sld [smem:[#allocation0]]
  $region9: #{tpu_custom_call.1} parent=0
    _
  %s5 = ssub.s32 1, %s3
  %s6 = scalar_select 0, %s5, %s3
  loop: start=0, step=1, limit=2
  $region2: #{tpu_custom_call.1} parent=0 // loop_pre_header
    _
  $region3: #{tpu_custom_call.1} parent=0 // loop_header
    %s8 = sphi 0, %s12
    %p9 = scmp.ge.s32.totalorder %s8, 2
  $region4: #{tpu_custom_call.1} parent=0 // loop_header_branch
    %11 = sbr.rel (%p9) target = $region8
  $region5: #{tpu_custom_call.1} parent=0 // loop_body
    #allocation4 [shape = 'u32[3]{0}', space=smem, size = 0xc, scoped, tag = 'DMA stride descriptor']
    #allocation6 [shape = 'u32[3]{0}', space=smem, size = 0xc, scoped, tag = 'DMA stride descriptor']
    %s13 = sadd.s32 %s8, 1
    %s14 = sshrl.u32 %s8, 1
    %s15 = sand.u32 %s8, 1
    %s16 = smul.u32 %s14, 16
    %s17 = sadd.s32 %s15, %s16
    %s18 = smul.addr %s17, 16
    %s19 = scalar_lea.hbm %s0, %s18
    %s20 = smul.u32 %s14, 40
    %s21 = sadd.s32 %s15, %s20
    %s22 = smul.addr %s21, 16
    %s23 = scalar_lea.hbm %s2, %s22
    %s25 = sshll.u32 1, 14
    %s26 = sxor.u32 4294967295, %s25
    %s29 = sshll.u32 3, 24
    %s30 = sxor.u32 4294967295, %s29
    %s31 = sand.u32 0, %s30
    %s33 = sor.u32 %s31, 0
    %36 = sst [smem:[#allocation4]] 32
    %s37 = scalar_lea.smem [#allocation4], 1
    %38 = sst [smem:[%s37]] 32
    %s39 = scalar_lea.smem [#allocation4], 2
    %40 = sst [smem:[%s39]] 1
    %42 = dma.general %s19, 128, %s23, [#allocation2], [#allocation3], [#allocation4], %s33, 0
    %s43 = smul.u32 %s14, 24
    %s44 = sadd.s32 %s15, %s43
    %s45 = smul.addr %s44, 16
    %s46 = scalar_lea.hbm %s1, %s45
    %s47 = sadd.s32 16, %s21
    %s48 = smul.addr %s47, 16
    %s49 = scalar_lea.hbm %s2, %s48
    %s50 = scalar_lea.sflag [#allocation2], 1
    %s52 = sshll.u32 1, 14
    %s53 = sxor.u32 4294967295, %s52
    %s56 = sshll.u32 3, 24
    %s57 = sxor.u32 4294967295, %s56
    %s58 = sand.u32 0, %s57
    %s60 = sor.u32 %s58, 0
    %63 = sst [smem:[#allocation6]] 32
    %s64 = scalar_lea.smem [#allocation6], 1
    %65 = sst [smem:[%s64]] 32
    %s66 = scalar_lea.smem [#allocation6], 2
    %67 = sst [smem:[%s66]] 1
    %69 = dma.general %s46, 192, %s49, %s50, [#allocation5], [#allocation6], %s60, 0
    %s70 = smul.u32 1, 8
    %s71 = sshll.u32 %s70, 4
    %72 = dma.done [#allocation2], %s71
    %s73 = smul.u32 1, 12
    %s74 = sshll.u32 %s73, 4
    %75 = dma.done %s50, %s74
  $region6: #{tpu_custom_call.1} parent=0 // loop_footer
    %s12 = sadd.s32 1, %s8
  $region7: #{tpu_custom_call.1} parent=0 // loop_footer_branch
    %7 = sbr.rel target = $region3
  $region8: #{tpu_custom_call.1} parent=0 // loop_exit
    _
  %76 = vsyncmov [#allocation2]
  %s77 = vpop.sfrf %76
  %p78 = scmp.eq.s32.totalorder %s77, 0
  %p79 = pneg %p78
  %81 = shalt.err (%p79)
  %s82 = scalar_lea.sflag [#allocation2], 1
  %83 = vsyncmov %s82
  %s84 = vpop.sfrf %83
  %p85 = scmp.eq.s32.totalorder %s84, 0
  %p86 = pneg %p85
  %88 = shalt.err (%p86)

</llo_original>
